<compile_context>
chip_gen: v6e
topology: v6e:2x2x1
jax: 0.10.0
libtpu: 0.0.40
codegen_flags: <defaults>
</compile_context>

<pallas_src>
import jax
import jax.numpy as jnp
from jax import lax
from jax.experimental import pallas as pl
from jax.experimental.pallas import tpu as pltpu


def ffn_kernel(x_ref, w_ref, b_ref, o_ref, acc_ref):
    """One (tm, tn) output tile, accumulated over the K (in_features) grid axis.

    x_ref  : (tm, tk) compute dtype (bf16 by default)
    w_ref  : (tn, tk) PyTorch nn.Linear layout (out_features, in_features)
    b_ref  : (1, tn)  f32
    o_ref  : (tm, tn) output dtype
    acc_ref: (tm, tn) f32 VMEM scratch, persists across the K axis
    """
    k = pl.program_id(2)

    @pl.when(k == 0)
    def _init():
        acc_ref[...] = jnp.zeros_like(acc_ref)

    # ReLU on the activation tile (elementwise VPU work, hidden under the MXU).
    x = jnp.maximum(x_ref[...], 0).astype(x_ref.dtype)

    # Contract x's axis 1 with W's in_features axis directly (== x @ W.T):
    # no transpose ever materializes inside the kernel.
    acc_ref[...] += lax.dot_general(
        x, w_ref[...],
        dimension_numbers=(((1,), (1,)), ((), ())),
        preferred_element_type=jnp.float32,
    )

    @pl.when(k == pl.num_programs(2) - 1)
    def _finalize():
        o_ref[...] = (acc_ref[...] + b_ref[...]).astype(o_ref.dtype)


def feedforward_nn(x, w, b, *, tm=256, tn=512, tk=512,
                   compute_dtype=jnp.bfloat16):
    """y = relu(x) @ W.T + b  (PyTorch nn.Linear weight layout).

    x: (B, S, E); w: (E, E); b: (E,). Returns (B, S, E) in x.dtype.
    """
    B, S, E = x.shape
    M = B * S

    # Clamp tiles to the problem size.
    tm = min(tm, M)
    tn = min(tn, E)
    tk = min(tk, E)
    assert M % tm == 0 and E % tn == 0 and E % tk == 0, "shapes must tile evenly"
    if compute_dtype == jnp.bfloat16:
        assert tm % 16 == 0 or tm == M, "bf16 sublane tile wants tm % 16 == 0"
    # TODO(synk): production shapes should pad E up to a multiple of 128 for
    # lane-dense stores; the toy E=32 case is accepted as-is.

    x2 = x.reshape(M, E).astype(compute_dtype)
    w2 = w.astype(compute_dtype)
    b2 = b.reshape(1, E).astype(jnp.float32)

    grid = (M // tm, E // tn, E // tk)

    # VMEM budget: double-buffered input/output tiles + f32 accumulator.
    cbytes = 2 if compute_dtype == jnp.bfloat16 else 4
    obytes = 2 if x.dtype == jnp.bfloat16 else 4
    need = (2 * (tm * tk + tn * tk) * cbytes   # x, w tiles (double buffered)
            + 2 * tm * tn * obytes             # output tile (double buffered)
            + 2 * tn * 4                       # bias tile
            + tm * tn * 4)                     # f32 accumulator scratch
    vmem_limit = int(min(max(2 * need, 32 * 1024 * 1024), 48 * 1024 * 1024))

    cost = pl.CostEstimate(
        flops=2 * M * E * E,
        transcendentals=0,
        bytes_accessed=(M * E * cbytes + E * E * cbytes + E * 4
                        + M * E * obytes),
    )

    out = pl.pallas_call(
        ffn_kernel,
        out_shape=jax.ShapeDtypeStruct((M, E), x.dtype),
        grid_spec=pltpu.PrefetchScalarGridSpec(
            num_scalar_prefetch=0,
            grid=grid,
            in_specs=[
                pl.BlockSpec((tm, tk), lambda i, j, k: (i, k)),   # activations
                pl.BlockSpec((tn, tk), lambda i, j, k: (j, k)),   # weight tile
                pl.BlockSpec((1, tn), lambda i, j, k: (0, j)),    # bias tile
            ],
            out_specs=pl.BlockSpec((tm, tn), lambda i, j, k: (i, j)),
            scratch_shapes=[pltpu.VMEM((tm, tn), jnp.float32)],
        ),
        compiler_params=pltpu.CompilerParams(
            dimension_semantics=("parallel", "parallel", "arbitrary"),
            vmem_limit_bytes=vmem_limit,
        ),
        cost_estimate=cost,
    )(x2, w2, b2)
    return out.reshape(B, S, E)


if __name__ == "__main__":
    key = jax.random.PRNGKey(0)
    k_x, k_w, k_b = jax.random.split(key, 3)

    batch, seq, embed = 2, 8, 32

    x = jax.random.normal(k_x, (batch, seq, embed), dtype=jnp.float32)
    # deterministic init mimicking nn.Linear's uniform(-1/sqrt(E), 1/sqrt(E))
    bound = 1.0 / jnp.sqrt(jnp.float32(embed))
    w = jax.random.uniform(k_w, (embed, embed), jnp.float32, -bound, bound)
    b = jax.random.uniform(k_b, (embed,), jnp.float32, -bound, bound)

    y = feedforward_nn(x, w, b)
    jax.block_until_ready(y)

    # correctness check vs pure-JAX f32 reference of fc(relu(x));
    # tolerance loosened because the kernel uses bf16 MXU operands.
    ref = jnp.maximum(x, 0.0) @ w.T + b
    assert jnp.allclose(y, ref, atol=2e-2, rtol=2e-2), "mismatch vs reference"

    print("KERNEL_OK")
</pallas_src>

<mosaic_0001>
module attributes {stable_mosaic.version = 11 : i64} {
  func.func @ffn_kernel(%arg0: i32, %arg1: i32, %arg2: i32, %arg3: memref<16x32xbf16, #tpu.memory_space<vmem>>, %arg4: memref<32x32xbf16, #tpu.memory_space<vmem>>, %arg5: memref<1x32xf32, #tpu.memory_space<vmem>>, %arg6: memref<16x32xf32, #tpu.memory_space<vmem>>, %arg7: memref<16x32xf32, #tpu.memory_space<vmem>>) attributes {dimension_semantics = [#tpu.dimension_semantics<parallel>, #tpu.dimension_semantics<parallel>, #tpu.dimension_semantics<arbitrary>], iteration_bounds = array<i64: 1, 1, 1>, scalar_prefetch = 0 : i64, scratch_operands = 1 : i64, tpu.core_type = #tpu.core_type<tc>, window_params = [{transform_indices = @transform_0, window_bounds = array<i64: 16, 32>}, {transform_indices = @transform_1, window_bounds = array<i64: 32, 32>}, {transform_indices = @transform_2, window_bounds = array<i64: 1, 32>}, {transform_indices = @transform_3, window_bounds = array<i64: 16, 32>}]} {
    %c0_i32 = arith.constant 0 : i32
    %0 = arith.cmpi eq, %arg2, %c0_i32 : i32
    %1 = arith.extui %0 : i1 to i32
    %c0_i32_0 = arith.constant 0 : i32
    %2 = arith.cmpi ne, %1, %c0_i32_0 : i32
    scf.if %2 {
      %cst_11 = arith.constant 0.000000e+00 : f32
      %14 = vector.broadcast %cst_11 : f32 to vector<16x32xf32>
      %c0_12 = arith.constant 0 : index
      %c0_13 = arith.constant 0 : index
      %15 = vector.load %arg7[%c0_12, %c0_13] : memref<16x32xf32, #tpu.memory_space<vmem>>, vector<16x32xf32>
      tpu.vector_store %arg7[%c0_12, %c0_13], %14 {strides = array<i32>} : memref<16x32xf32, #tpu.memory_space<vmem>>, vector<16x32xf32>,
    } else {
    }
    %c0 = arith.constant 0 : index
    %c0_1 = arith.constant 0 : index
    %3 = vector.load %arg3[%c0, %c0_1] : memref<16x32xbf16, #tpu.memory_space<vmem>>, vector<16x32xbf16>
    %cst = arith.constant 0.000000e+00 : bf16
    %4 = vector.broadcast %cst : bf16 to vector<16x32xbf16>
    %5 = arith.maximumf %3, %4 : vector<16x32xbf16>
    %c0_2 = arith.constant 0 : index
    %c0_3 = arith.constant 0 : index
    %6 = vector.load %arg7[%c0_2, %c0_3] : memref<16x32xf32, #tpu.memory_space<vmem>>, vector<16x32xf32>
    %c0_4 = arith.constant 0 : index
    %c0_5 = arith.constant 0 : index
    %7 = vector.load %arg4[%c0_4, %c0_5] : memref<32x32xbf16, #tpu.memory_space<vmem>>, vector<32x32xbf16>
    %cst_6 = arith.constant dense<0.000000e+00> : vector<16x32xf32>
    %8 = tpu.matmul %5, %7, %cst_6 {dimension_numbers = #tpu.dot_dimension_numbers<[1], [1], [0], [0], [0, 0, 1, 0], [], []>} : vector<16x32xbf16>, vector<32x32xbf16>, vector<16x32xf32> -> vector<16x32xf32>
    %9 = arith.addf %6, %8 : vector<16x32xf32>
    %c0_7 = arith.constant 0 : index
    %c0_8 = arith.constant 0 : index
    %10 = vector.load %arg7[%c0_7, %c0_8] : memref<16x32xf32, #tpu.memory_space<vmem>>, vector<16x32xf32>
    tpu.vector_store %arg7[%c0_7, %c0_8], %9 {strides = array<i32>} : memref<16x32xf32, #tpu.memory_space<vmem>>, vector<16x32xf32>,
    %c0_i32_9 = arith.constant 0 : i32
    %11 = arith.cmpi eq, %arg2, %c0_i32_9 : i32
    %12 = arith.extui %11 : i1 to i32
    %c0_i32_10 = arith.constant 0 : i32
    %13 = arith.cmpi ne, %12, %c0_i32_10 : i32
    scf.if %13 {
      %c0_11 = arith.constant 0 : index
      %c0_12 = arith.constant 0 : index
      %14 = vector.load %arg7[%c0_11, %c0_12] : memref<16x32xf32, #tpu.memory_space<vmem>>, vector<16x32xf32>
      %c0_13 = arith.constant 0 : index
      %c0_14 = arith.constant 0 : index
      %15 = vector.load %arg5[%c0_13, %c0_14] : memref<1x32xf32, #tpu.memory_space<vmem>>, vector<1x32xf32>
      %16 = vector.broadcast %15 : vector<1x32xf32> to vector<16x32xf32>
      %17 = arith.addf %14, %16 : vector<16x32xf32>
      %c0_15 = arith.constant 0 : index
      %c0_16 = arith.constant 0 : index
      %18 = vector.load %arg6[%c0_15, %c0_16] : memref<16x32xf32, #tpu.memory_space<vmem>>, vector<16x32xf32>
      tpu.vector_store %arg6[%c0_15, %c0_16], %17 {strides = array<i32>} : memref<16x32xf32, #tpu.memory_space<vmem>>, vector<16x32xf32>,
    } else {
    }
    return
  }
  func.func @transform_0(%arg0: i32, %arg1: i32, %arg2: i32) -> (i32, i32) {
    %c0_i32 = arith.constant 0 : i32
    return %arg0, %arg2 : i32, i32
  }
  func.func @transform_1(%arg0: i32, %arg1: i32, %arg2: i32) -> (i32, i32) {
    %c0_i32 = arith.constant 0 : i32
    return %arg1, %arg2 : i32, i32
  }
  func.func @transform_2(%arg0: i32, %arg1: i32, %arg2: i32) -> (i32, i32) {
    %c0_i32 = arith.constant 0 : i32
    %c0_i32_0 = arith.constant 0 : i32
    return %c0_i32, %arg1 : i32, i32
  }
  func.func @transform_3(%arg0: i32, %arg1: i32, %arg2: i32) -> (i32, i32) {
    %c0_i32 = arith.constant 0 : i32
    return %arg0, %arg1 : i32, i32
  }
}

</mosaic_0001>

<llo_original>
// kernel: tpu_custom_call.1
$region0: #{tpu_custom_call.1}
  #allocation0 [shape = 'u32[]', space=smem, size = 0x4, offset = 0x4, fixed_abs, tag = 'smem constant byte address 0x4 - core index']
  #allocation1 [shape = 'u32[144,128]{1,0:T(1,128)}', space=vmem, size = 0x12000, scoped, tag = 'internal scratch']
  #allocation2 [shape = 'f32[16,32]{1,0:T(8,128)}', space=vmem, size = 0x2000, scoped, tag = 'scratch operand']
  %s0 = inlined_call_operand.hbm [shape: bf16[16,32], index: 0, kind: input, shape index: {}]
  %s1 = inlined_call_operand.hbm [shape: bf16[32,32], index: 1, kind: input, shape index: {}]
  %s2 = inlined_call_operand.vmem [shape: f32[1,32], index: 2, kind: input, shape index: {}]
  %s3 = inlined_call_operand.hbm [shape: f32[16,32], index: 3, kind: output, shape index: {}]
  %s4 = sld [smem:[#allocation0]]
  $region38: #{tpu_custom_call.1} parent=0
    _
  %s6 = ssub.s32 1, %s4
  %s7 = scalar_select 0, %s6, %s4
  $region1: #{tpu_custom_call.1} parent=0
    #allocation3 [shape = 'u8[4096]{0}', space=vmem, size = 0x1000, scoped, tag = 'input window, operand 0, single buffered']
    #allocation4 [shape = 's32[1]{0}', space=sflag, size = 0x4, scoped, tag = 'scoped memory for tpu_custom_call.1']
    #allocation5 [shape = 's32[1]{0}', space=sflag, size = 0x4, scoped, tag = 'scoped memory for tpu_custom_call.1']
    #allocation6 [shape = 'u8[8192]{0}', space=vmem, size = 0x2000, scoped, tag = 'input window, operand 1, single buffered']
    #allocation7 [shape = 's32[1]{0}', space=sflag, size = 0x4, scoped, tag = 'scoped memory for tpu_custom_call.1']
    #allocation8 [shape = 'u8[8192]{0}', space=vmem, size = 0x2000, scoped, tag = 'output window, operand 0, single buffered']
    %8 = vsyncpa [#allocation4], 0
    %9 = vsyncpa [#allocation7], 0
    %10 = vsyncpa [#allocation5], 0
    // Predicated region
    $region2: #{tpu_custom_call.1} parent=1 // pred_check
      _
    $region3: #{tpu_custom_call.1} parent=1 // pred_check_branch
      %12 = sbr.rel (0) target = $region5
    $region4: #{tpu_custom_call.1} parent=1 // pred_region
      %s14 = ssub.s32 128, 128
      %15 = vsyncadd [#allocation4], %s14
      %s16 = sshll.u32 [#allocation3], 4
      %s17 = int_to_ptr.vmem [resolvable:$true] %s16
      %22 = dma.hbm_to_vmem [thread:$0]  %s0, 128, %s17, [#allocation4], 64, 64, 4
    $region5: #{tpu_custom_call.1} parent=1 // pred_fallthru
      _
    // Predicated region
    $region6: #{tpu_custom_call.1} parent=1 // pred_check
      _
    $region7: #{tpu_custom_call.1} parent=1 // pred_check_branch
      %24 = sbr.rel (0) target = $region9
    $region8: #{tpu_custom_call.1} parent=1 // pred_region
      %s26 = ssub.s32 256, 256
      %27 = vsyncadd [#allocation7], %s26
      %s28 = sshll.u32 [#allocation6], 4
      %s29 = int_to_ptr.vmem [resolvable:$true] %s28
      %34 = dma.hbm_to_vmem [thread:$0]  %s1, 256, %s29, [#allocation7], 64, 64, 4
    $region9: #{tpu_custom_call.1} parent=1 // pred_fallthru
      _
    // Predicated region
    $region10: #{tpu_custom_call.1} parent=1 // pred_check
      _
    $region11: #{tpu_custom_call.1} parent=1 // pred_check_branch
      %36 = sbr.rel (0) target = $region13
    $region12: #{tpu_custom_call.1} parent=1 // pred_region
      _
    $region13: #{tpu_custom_call.1} parent=1 // pred_fallthru
      _
    // Predicated region
    $region14: #{tpu_custom_call.1} parent=1 // pred_check
      _
    $region15: #{tpu_custom_call.1} parent=1 // pred_check_branch
      %38 = sbr.rel (0) target = $region17
    $region16: #{tpu_custom_call.1} parent=1 // pred_region
      %39 = dma.done [#allocation4], 128
    $region17: #{tpu_custom_call.1} parent=1 // pred_fallthru
      _
    // Predicated region
    $region18: #{tpu_custom_call.1} parent=1 // pred_check
      _
    $region19: #{tpu_custom_call.1} parent=1 // pred_check_branch
      %41 = sbr.rel (0) target = $region21
    $region20: #{tpu_custom_call.1} parent=1 // pred_region
      %42 = dma.done [#allocation7], 256
    $region21: #{tpu_custom_call.1} parent=1 // pred_fallthru
      _
    %p44 = scmp.eq.s32.totalorder 0, 0
    // Predicated region
    $region22: #{tpu_custom_call.1} parent=1 // pred_check
      %p45 = pneg %p44
    $region23: #{tpu_custom_call.1} parent=1 // pred_check_branch
      %47 = sbr.rel (%p45) target = $region25
    $region24: #{tpu_custom_call.1} parent=1 // pred_region
      %vm48 = vcmask 261120
      %49 = vst.msk [vmem:[#allocation2] sm:$0xff] %vm48, 0.0
      %50 = vst.msk [vmem:[#allocation2 + $0x8] sm:$0xff] %vm48, 0.0
    $region25: #{tpu_custom_call.1} parent=1 // pred_fallthru
      _
    %v51 = vld [vmem:[#allocation3] sm:$0xf]
    %v52 = vld [vmem:[#allocation3 + $0x4] sm:$0xf]
    %v53 = vmax.bf16 %v51, 0
    %v54 = vmax.bf16 %v52, 0
    %v55 = vld [vmem:[#allocation2] sm:$0xff]
    %v56 = vld [vmem:[#allocation2 + $0x8] sm:$0xff]
    %v57 = vld [vmem:[#allocation6] sm:$0xf]
    %v58 = vld [vmem:[#allocation6 + $0x4] sm:$0xf]
    %v59 = vld [vmem:[#allocation6 + $0x8] sm:$0xf]
    %v60 = vld [vmem:[#allocation6 + $0xc] sm:$0xf]
    %v63 = vunpack.c.l.b16 %v53
    %v64 = vunpack.c.l.b16 %v54
    %v65 = vpack.c.b16 %v64, %v63
    %v70 = vunpack.c.l.b16 %v57
    %v71 = vunpack.c.l.b16 %v58
    %v72 = vunpack.c.l.b16 %v59
    %v73 = vunpack.c.l.b16 %v60
    %v74 = vpack.c.b16 %v71, %v70
    %v75 = vpack.c.b16 %v73, %v72
    %vm76 = vcmask 261120
    %v78 = vsel %vm76, %v65, 0
    %v81 = vsel %vm76, %v74, 0
    %v84 = vsel %vm76, %v75, 0
    %86 = vmatprep.subr.bf16.mxu0 0
    %87 = vmatpush1.bf16.xpose.msra.mxu0 0
    %88 = vmatprep.subr.bf16.mxu0 0
    %89 = vmatpush1.bf16.xpose.msra.mxu0 0
    %90 = vmatprep.subr.bf16.mxu0 0
    %91 = vmatpush1.bf16.xpose.msra.mxu0 0
    %92 = vmatprep.subr.bf16.mxu0 0
    %93 = vmatpush1.bf16.xpose.msra.mxu0 0
    %94 = vmatprep.subr.bf16.mxu0 0
    %95 = vmatpush1.bf16.xpose.msra.mxu0 0
    %96 = vmatprep.subr.bf16.mxu0 0
    %97 = vmatpush1.bf16.xpose.msra.mxu0 0
    %98 = vmatprep.subr.bf16.mxu0 0
    %99 = vmatpush1.bf16.xpose.msra.mxu0 %v84
    %100 = vmatprep.subr.bf16.mxu0 0
    %101 = vmatpush1.bf16.xpose.msra.mxu0 %v81
    %102 = vmatprep.subr.bf16.mxu0 0
    %103 = vmatpush2.bf16.xpose.msra.mxu0 0
    %104 = vmatprep.subr.bf16.mxu0 0
    %105 = vmatpush2.bf16.xpose.msra.mxu0 0
    %106 = vmatprep.subr.bf16.mxu0 0
    %107 = vmatpush2.bf16.xpose.msra.mxu0 0
    %108 = vmatprep.subr.bf16.mxu0 0
    %109 = vmatpush2.bf16.xpose.msra.mxu0 0
    %110 = vmatprep.subr.bf16.mxu0 0
    %111 = vmatpush2.bf16.xpose.msra.mxu0 0
    %112 = vmatprep.subr.bf16.mxu0 0
    %113 = vmatpush2.bf16.xpose.msra.mxu0 0
    %114 = vmatprep.subr.bf16.mxu0 0
    %115 = vmatpush2.bf16.xpose.msra.mxu0 0
    %116 = vmatprep.subr.bf16.mxu0 0
    %117 = vmatpush2.bf16.xpose.msra.mxu0 0
    %118 = vmatprep.mubr.bf16.mxu0 0
    %119 = vmatmul.mubr.bf16.gmra.mxu0 %v78
    %v120 = vpop.f32.mrf.mxu0
    %v121 = vadd.f32 0.0, %v120
    %v122 = vpop.f32.mrf.mxu0
    %v123 = vpop.f32.mrf.mxu0
    %v124 = vadd.f32 0.0, %v123
    %v125 = vpop.f32.mrf.mxu0
    %126 = vdwg.mxu0
    %v127 = vadd.f32 %v55, %v121
    %v128 = vadd.f32 %v56, %v124
    %129 = vst.msk [vmem:[#allocation2] sm:$0xff] %vm76, %v127
    %130 = vst.msk [vmem:[#allocation2 + $0x8] sm:$0xff] %vm76, %v128
    // Predicated region
    $region26: #{tpu_custom_call.1} parent=1 // pred_check
      %p131 = pneg %p44
    $region27: #{tpu_custom_call.1} parent=1 // pred_check_branch
      %133 = sbr.rel (%p131) target = $region29
    $region28: #{tpu_custom_call.1} parent=1 // pred_region
      %v134 = vld [vmem:[#allocation2] sm:$0xff]
      %v135 = vld [vmem:[#allocation2 + $0x8] sm:$0xff]
      %v136 = vld [vmem:[%s2] sm:$0x1]
      %v138 = vlaneseq
      %v139 = vshrl.u32 %v138, 7
      %v140 = vsub.s32 0, %v139
      %v141 = vrot.slane %v136, %v140
      %v143 = vadd.f32 %v134, %v141
      %v144 = vadd.f32 %v135, %v141
      %145 = vst.msk [vmem:[#allocation8] sm:$0xff] %vm76, %v143
      %146 = vst.msk [vmem:[#allocation8 + $0x8] sm:$0xff] %vm76, %v144
    $region29: #{tpu_custom_call.1} parent=1 // pred_fallthru
      _
    // Predicated region
    $region30: #{tpu_custom_call.1} parent=1 // pred_check
      _
    $region31: #{tpu_custom_call.1} parent=1 // pred_check_branch
      %148 = sbr.rel (0) target = $region33
    $region32: #{tpu_custom_call.1} parent=1 // pred_region
      %s150 = ssub.s32 256, 256
      %151 = vsyncadd [#allocation5], %s150
      %s152 = sshll.u32 [#allocation8], 4
      %s153 = int_to_ptr.vmem [resolvable:$true] %s152
      %158 = dma.vmem_to_hbm [thread:$0]  %s153, 256, %s3, [#allocation5], 128, 128, 8
    $region33: #{tpu_custom_call.1} parent=1 // pred_fallthru
      _
    // Predicated region
    $region34: #{tpu_custom_call.1} parent=1 // pred_check
      _
    $region35: #{tpu_custom_call.1} parent=1 // pred_check_branch
      %160 = sbr.rel (0) target = $region37
    $region36: #{tpu_custom_call.1} parent=1 // pred_region
      %161 = dma.done [#allocation5], 256
    $region37: #{tpu_custom_call.1} parent=1 // pred_fallthru
      _
    %162 = vsyncpa [#allocation4], 1
    %163 = vsyncpa [#allocation7], 1
    %164 = vsyncpa [#allocation5], 1

</llo_original>
